<compile_context>
chip_gen: v6e
topology: v6e:2x2x1
jax: 0.10.0
libtpu: 0.0.40
codegen_flags: <defaults>
</compile_context>

<pallas_src>
import math

import jax
import jax.numpy as jnp
from jax.experimental import pallas as pl
from jax.experimental.pallas import tpu as pltpu


def _round_up(a, m):
    return ((a + m - 1) // m) * m


def _vmem_capacity_bytes():
    """Physical VMEM of the current chip; conservative fallback if unknown."""
    try:
        return int(pltpu.get_tpu_info().vmem_capacity_bytes)
    except Exception:
        return 64 * 1024 * 1024  # v7x-sized: safe on every generation


def _ffn_vmem_bytes(tm, th, E_pad, cd_bytes, out_bytes):
    """Estimated VMEM footprint of one kernel instance (buffers + scratch)."""
    # Single-buffered (pl.Buffered(1)): only change once per token tile.
    single = (tm * E_pad * cd_bytes          # x tile
              + E_pad * 4                    # b2
              + tm * E_pad * out_bytes)      # output tile
    # Double-buffered (default): change every hidden step.
    double = 2 * (E_pad * th * cd_bytes      # w1 slab
                  + th * 4                   # b1 slab
                  + th * E_pad * cd_bytes)   # w2 slab
    # Scratch: explicit f32 accumulator + the materialized fc1 intermediate
    # (f32 result of the first dot and its bf16 re-cast before the second dot).
    scratch = (tm * E_pad * 4
               + tm * th * 4
               + tm * th * cd_bytes)
    return single + double + scratch


def ffn_kernel(x_ref, w1_ref, b1_ref, w2_ref, b2_ref, o_ref, acc_ref):
    # x_ref:  (tm, E)   bf16 token tile
    # w1_ref: (E,  th)  bf16 fc1 weight slab (columns of the hidden dim)
    # b1_ref: (1,  th)  f32
    # w2_ref: (th, E)   bf16 fc2 weight slab (rows of the hidden dim)
    # b2_ref: (1,  E)   f32
    # o_ref:  (tm, E)   output tile (written on last H step)
    # acc_ref:(tm, E)   f32 accumulator (VMEM scratch)
    h_idx = pl.program_id(1)

    @pl.when(h_idx == 0)
    def _init():
        acc_ref[...] = jnp.broadcast_to(
            b2_ref[...].astype(jnp.float32), acc_ref.shape
        )

    # fc1 slab: (tm, E) @ (E, th) -> f32, bias + ReLU in f32.
    h = jnp.dot(x_ref[...], w1_ref[...], preferred_element_type=jnp.float32)
    h = jnp.maximum(h + b1_ref[...], 0.0)

    # fc2 slab: cast activations to the matmul dtype, accumulate in f32.
    acc_ref[...] += jnp.dot(
        h.astype(w2_ref.dtype), w2_ref[...], preferred_element_type=jnp.float32
    )

    @pl.when(h_idx == pl.num_programs(1) - 1)
    def _finalize():
        o_ref[...] = acc_ref[...].astype(o_ref.dtype)


def prepare_ffn_params(w1, b1, w2, b2, *, th=None, tm_hint=None,
                       compute_dtype=jnp.bfloat16):
    """One-time pad + bf16 cast of the FFN weights (hoist out of the hot path).

    w1: [E, H], b1: [H]   (torch fc1 weight transposed to [in, out])
    w2: [H, E], b2: [E]   (torch fc2 weight transposed to [in, out])
    """
    E, H = w1.shape
    vmem_cap = _vmem_capacity_bytes()

    # Lane/output axis: 128-aligned always; bump to a 256 multiple once it is
    # >= 256 so the 2x256^2 MXUs on v6e/v7x run full-width passes.
    E_pad = _round_up(E, 128)
    if E_pad >= 256:
        E_pad = _round_up(E_pad, 256)

    if tm_hint is None:
        # Bigger token tiles on 128 MiB parts (v5e/v6e) cut weight re-streaming;
        # smaller default on 64 MiB parts (v7x).
        tm_hint = 1024 if vmem_cap >= 96 * 1024 * 1024 else 512
    if th is None:
        th = 1024
    th = _round_up(min(th, _round_up(H, 128)), 128)

    # Shrink the hidden tile until the kernel (at the token-tile hint) fits
    # ~85% of this chip's VMEM.  Assume f32 output for the budget.
    cd = jnp.dtype(compute_dtype).itemsize
    budget = int(vmem_cap * 0.85)
    while th > 128 and _ffn_vmem_bytes(tm_hint, th, E_pad, cd, 4) > budget:
        th = _round_up(th // 2, 128)

    H_pad = _round_up(H, th)

    def pad2(a, r, c):
        pr, pc = r - a.shape[0], c - a.shape[1]
        return jnp.pad(a, ((0, pr), (0, pc))) if (pr or pc) else a

    return dict(
        w1=pad2(jnp.asarray(w1), E_pad, H_pad).astype(compute_dtype),
        b1=pad2(jnp.asarray(b1).reshape(1, H), 1, H_pad).astype(jnp.float32),
        w2=pad2(jnp.asarray(w2), H_pad, E_pad).astype(compute_dtype),
        b2=pad2(jnp.asarray(b2).reshape(1, E), 1, E_pad).astype(jnp.float32),
        E=E, H=H, E_pad=E_pad, H_pad=H_pad, th=th, tm_hint=tm_hint,
        compute_dtype=compute_dtype,
    )


def feed_forward(x, params, *, tm=None):
    """FFN forward: relu(x @ w1 + b1) @ w2 + b2.

    x: [T, E]  (tokens, embed) -- batch/seq flattened by the caller.
    params: output of prepare_ffn_params (weights already padded + cast).
    """
    T, E = x.shape
    assert E == params["E"], "embed size mismatch with prepared params"
    E_pad, H_pad, th = params["E_pad"], params["H_pad"], params["th"]
    compute_dtype = params["compute_dtype"]
    out_dtype = x.dtype

    cd = jnp.dtype(compute_dtype).itemsize
    ob = jnp.dtype(out_dtype).itemsize
    vmem_cap = _vmem_capacity_bytes()
    budget = int(vmem_cap * 0.85)

    # --- token tile ---------------------------------------------------------
    if tm is None:
        tm = params["tm_hint"]
    tm = _round_up(min(tm, _round_up(T, 16)), 16)
    # Keep >= 2 token tiles when possible so the "parallel" axis can split
    # across v7x's two TensorCores (a single extra grid step is cheap on
    # single-core v5e/v6e).
    if T > 16:
        tm = min(tm, _round_up((T + 1) // 2, 16))
    # Shrink until the footprint fits this chip's VMEM.
    while tm > 16 and _ffn_vmem_bytes(tm, th, E_pad, cd, ob) > budget:
        tm = _round_up(tm // 2, 16)

    T_pad = _round_up(T, tm)

    # --- pad activations (weights were padded once in prepare_ffn_params) ---
    x_p = x
    if (T_pad - T) or (E_pad - E):
        x_p = jnp.pad(x, ((0, T_pad - T), (0, E_pad - E)))
    x_p = x_p.astype(compute_dtype)

    grid = (T_pad // tm, H_pad // th)
    n_token_tiles = grid[0]

    vmem_est = _ffn_vmem_bytes(tm, th, E_pad, cd, ob)
    vmem_limit = int(min(max(int(vmem_est * 1.25), 32 * 1024 * 1024),
                         int(vmem_cap * 0.9)))

    # Realistic HBM traffic: 2-byte operands, weight slabs re-streamed once per
    # token tile.
    cost = pl.CostEstimate(
        flops=4 * T_pad * E_pad * H_pad,             # two matmuls, 2 flops/MAC
        transcendentals=0,
        bytes_accessed=(
            T_pad * E_pad * cd                                    # x read
            + n_token_tiles * (2 * E_pad * H_pad * cd             # w1 + w2
                               + H_pad * 4 + E_pad * 4)           # biases
            + T_pad * E_pad * ob                                  # output write
        ),
    )

    def make_call(single_buffer_invariants):
        # x tile, b2 and the output only turn over once per token tile, so a
        # single VMEM buffer is enough for them; weights stay double-buffered.
        inv = (dict(pipeline_mode=pl.Buffered(1))
               if single_buffer_invariants else {})
        return pl.pallas_call(
            ffn_kernel,
            out_shape=jax.ShapeDtypeStruct((T_pad, E_pad), out_dtype),
            grid_spec=pltpu.PrefetchScalarGridSpec(
                num_scalar_prefetch=0,
                grid=grid,
                in_specs=[
                    pl.BlockSpec((tm, E_pad), lambda i, h: (i, 0), **inv),  # x
                    pl.BlockSpec((E_pad, th), lambda i, h: (0, h)),         # w1
                    pl.BlockSpec((1, th),     lambda i, h: (0, h)),         # b1
                    pl.BlockSpec((th, E_pad), lambda i, h: (h, 0)),         # w2
                    pl.BlockSpec((1, E_pad),  lambda i, h: (0, 0), **inv),  # b2
                ],
                out_specs=pl.BlockSpec((tm, E_pad), lambda i, h: (i, 0), **inv),
                scratch_shapes=[pltpu.VMEM((tm, E_pad), jnp.float32)],
            ),
            compiler_params=pltpu.CompilerParams(
                dimension_semantics=("parallel", "arbitrary"),
                vmem_limit_bytes=vmem_limit,
            ),
            cost_estimate=cost,
        )

    args = (x_p, params["w1"], params["b1"], params["w2"], params["b2"])
    try:
        out = make_call(True)(*args)
    except Exception:
        # pl.Buffered(1) not supported by this jax/libtpu combo -- fall back to
        # default double buffering (identical results, a bit more VMEM).
        # Note: this fallback only triggers when feed_forward runs eagerly.
        out = make_call(False)(*args)

    return out[:T, :E]


def _init_linear(key, in_f, out_f):
    """Mirror torch.nn.Linear default init (uniform +/- 1/sqrt(in))."""
    kw, kb = jax.random.split(key)
    bound = 1.0 / math.sqrt(in_f)
    # torch stores weight as [out, in]; we keep [in, out] for the kernel.
    w = jax.random.uniform(kw, (in_f, out_f), jnp.float32, -bound, bound)
    b = jax.random.uniform(kb, (out_f,), jnp.float32, -bound, bound)
    return w, b


if __name__ == "__main__":
    # Small shapes implied by the module: batch=2, seq=8, embed=32, expansion=4.
    batch, seq, embed, expansion = 2, 8, 32, 4
    hidden = expansion * embed  # 128

    key = jax.random.PRNGKey(0)
    kx, k1, k2 = jax.random.split(key, 3)

    x = jax.random.normal(kx, (batch, seq, embed), jnp.float32)
    w1, b1 = _init_linear(k1, embed, hidden)   # fc1
    w2, b2 = _init_linear(k2, hidden, embed)   # fc2

    # One-time weight preparation (pad + bf16 cast hoisted out of the hot path).
    params = prepare_ffn_params(w1, b1, w2, b2)

    # Flatten (batch, seq) -> tokens for the kernel; restore afterwards.
    x2d = x.reshape(batch * seq, embed)
    y2d = feed_forward(x2d, params)
    y = y2d.reshape(batch, seq, embed)
    jax.block_until_ready(y)

    # Reference 1: mimic the kernel's bf16-operand / f32-accumulate math.
    f32 = jnp.float32
    xb = x2d.astype(jnp.bfloat16).astype(f32)
    w1b = w1.astype(jnp.bfloat16).astype(f32)
    w2b = w2.astype(jnp.bfloat16).astype(f32)
    h_ref = jnp.maximum(xb @ w1b + b1, 0.0)
    ref_bf16 = h_ref.astype(jnp.bfloat16).astype(f32) @ w2b + b2
    assert jnp.allclose(y2d, ref_bf16, atol=2e-3, rtol=2e-3), \
        "mismatch vs bf16-mimic reference"

    # Reference 2: loose sanity check against the pure-f32 math.
    ref_f32 = jnp.maximum(x2d @ w1 + b1, 0.0) @ w2 + b2
    assert jnp.allclose(y2d, ref_f32, atol=5e-2, rtol=5e-2), \
        "mismatch vs f32 reference"

    print("KERNEL_OK")
</pallas_src>

<mosaic_0001>
module attributes {stable_mosaic.version = 11 : i64} {
  func.func @ffn_kernel(%arg0: i32, %arg1: i32, %arg2: memref<16x128xbf16, #tpu.memory_space<vmem>>, %arg3: memref<128x128xbf16, #tpu.memory_space<vmem>>, %arg4: memref<1x128xf32, #tpu.memory_space<vmem>>, %arg5: memref<128x128xbf16, #tpu.memory_space<vmem>>, %arg6: memref<1x128xf32, #tpu.memory_space<vmem>>, %arg7: memref<16x128xf32, #tpu.memory_space<vmem>>, %arg8: memref<16x128xf32, #tpu.memory_space<vmem>>) attributes {dimension_semantics = [#tpu.dimension_semantics<parallel>, #tpu.dimension_semantics<arbitrary>], iteration_bounds = array<i64: 1, 1>, scalar_prefetch = 0 : i64, scratch_operands = 1 : i64, tpu.core_type = #tpu.core_type<tc>, window_params = [{pipeline_mode = #tpu.pipeline_mode<synchronous>, transform_indices = @transform_0, window_bounds = array<i64: 16, 128>}, {transform_indices = @transform_1, window_bounds = array<i64: 128, 128>}, {transform_indices = @transform_2, window_bounds = array<i64: 1, 128>}, {transform_indices = @transform_3, window_bounds = array<i64: 128, 128>}, {pipeline_mode = #tpu.pipeline_mode<synchronous>, transform_indices = @transform_4, window_bounds = array<i64: 1, 128>}, {pipeline_mode = #tpu.pipeline_mode<synchronous>, transform_indices = @transform_5, window_bounds = array<i64: 16, 128>}]} {
    %c0_i32 = arith.constant 0 : i32
    %0 = arith.cmpi eq, %arg1, %c0_i32 : i32
    %1 = arith.extui %0 : i1 to i32
    %c0_i32_0 = arith.constant 0 : i32
    %2 = arith.cmpi ne, %1, %c0_i32_0 : i32
    scf.if %2 {
      %c0_16 = arith.constant 0 : index
      %c0_17 = arith.constant 0 : index
      %20 = vector.load %arg6[%c0_16, %c0_17] : memref<1x128xf32, #tpu.memory_space<vmem>>, vector<1x128xf32>
      %21 = vector.shape_cast %20 : vector<1x128xf32> to vector<1x128xf32>
      %22 = vector.broadcast %21 : vector<1x128xf32> to vector<16x128xf32>
      %c0_18 = arith.constant 0 : index
      %c0_19 = arith.constant 0 : index
      %23 = vector.load %arg8[%c0_18, %c0_19] : memref<16x128xf32, #tpu.memory_space<vmem>>, vector<16x128xf32>
      tpu.vector_store %arg8[%c0_18, %c0_19], %22 {strides = array<i32>} : memref<16x128xf32, #tpu.memory_space<vmem>>, vector<16x128xf32>,
    } else {
    }
    %c0 = arith.constant 0 : index
    %c0_1 = arith.constant 0 : index
    %3 = vector.load %arg2[%c0, %c0_1] : memref<16x128xbf16, #tpu.memory_space<vmem>>, vector<16x128xbf16>
    %c0_2 = arith.constant 0 : index
    %c0_3 = arith.constant 0 : index
    %4 = vector.load %arg3[%c0_2, %c0_3] : memref<128x128xbf16, #tpu.memory_space<vmem>>, vector<128x128xbf16>
    %cst = arith.constant dense<0.000000e+00> : vector<16x128xf32>
    %5 = tpu.matmul %3, %4, %cst {dimension_numbers = #tpu.dot_dimension_numbers<[1], [0], [0], [1], [0, 0, 1, 1], [], []>} : vector<16x128xbf16>, vector<128x128xbf16>, vector<16x128xf32> -> vector<16x128xf32>
    %c0_4 = arith.constant 0 : index
    %c0_5 = arith.constant 0 : index
    %6 = vector.load %arg4[%c0_4, %c0_5] : memref<1x128xf32, #tpu.memory_space<vmem>>, vector<1x128xf32>
    %7 = vector.broadcast %6 : vector<1x128xf32> to vector<16x128xf32>
    %8 = arith.addf %5, %7 : vector<16x128xf32>
    %cst_6 = arith.constant 0.000000e+00 : f32
    %9 = vector.broadcast %cst_6 : f32 to vector<16x128xf32>
    %10 = arith.maximumf %8, %9 : vector<16x128xf32>
    %c0_7 = arith.constant 0 : index
    %c0_8 = arith.constant 0 : index
    %11 = vector.load %arg8[%c0_7, %c0_8] : memref<16x128xf32, #tpu.memory_space<vmem>>, vector<16x128xf32>
    %12 = arith.truncf %10 : vector<16x128xf32> to vector<16x128xbf16>
    %c0_9 = arith.constant 0 : index
    %c0_10 = arith.constant 0 : index
    %13 = vector.load %arg5[%c0_9, %c0_10] : memref<128x128xbf16, #tpu.memory_space<vmem>>, vector<128x128xbf16>
    %cst_11 = arith.constant dense<0.000000e+00> : vector<16x128xf32>
    %14 = tpu.matmul %12, %13, %cst_11 {dimension_numbers = #tpu.dot_dimension_numbers<[1], [0], [0], [1], [0, 0, 1, 1], [], []>} : vector<16x128xbf16>, vector<128x128xbf16>, vector<16x128xf32> -> vector<16x128xf32>
    %15 = arith.addf %11, %14 : vector<16x128xf32>
    %c0_12 = arith.constant 0 : index
    %c0_13 = arith.constant 0 : index
    %16 = vector.load %arg8[%c0_12, %c0_13] : memref<16x128xf32, #tpu.memory_space<vmem>>, vector<16x128xf32>
    tpu.vector_store %arg8[%c0_12, %c0_13], %15 {strides = array<i32>} : memref<16x128xf32, #tpu.memory_space<vmem>>, vector<16x128xf32>,
    %c0_i32_14 = arith.constant 0 : i32
    %17 = arith.cmpi eq, %arg1, %c0_i32_14 : i32
    %18 = arith.extui %17 : i1 to i32
    %c0_i32_15 = arith.constant 0 : i32
    %19 = arith.cmpi ne, %18, %c0_i32_15 : i32
    scf.if %19 {
      %c0_16 = arith.constant 0 : index
      %c0_17 = arith.constant 0 : index
      %20 = vector.load %arg8[%c0_16, %c0_17] : memref<16x128xf32, #tpu.memory_space<vmem>>, vector<16x128xf32>
      %c0_18 = arith.constant 0 : index
      %c0_19 = arith.constant 0 : index
      %21 = vector.load %arg7[%c0_18, %c0_19] : memref<16x128xf32, #tpu.memory_space<vmem>>, vector<16x128xf32>
      tpu.vector_store %arg7[%c0_18, %c0_19], %20 {strides = array<i32>} : memref<16x128xf32, #tpu.memory_space<vmem>>, vector<16x128xf32>,
    } else {
    }
    return
  }
  func.func @transform_0(%arg0: i32, %arg1: i32) -> (i32, i32) {
    %c0_i32 = arith.constant 0 : i32
    %c0_i32_0 = arith.constant 0 : i32
    return %arg0, %c0_i32 : i32, i32
  }
  func.func @transform_1(%arg0: i32, %arg1: i32) -> (i32, i32) {
    %c0_i32 = arith.constant 0 : i32
    %c0_i32_0 = arith.constant 0 : i32
    return %c0_i32, %arg1 : i32, i32
  }
  func.func @transform_2(%arg0: i32, %arg1: i32) -> (i32, i32) {
    %c0_i32 = arith.constant 0 : i32
    %c0_i32_0 = arith.constant 0 : i32
    return %c0_i32, %arg1 : i32, i32
  }
  func.func @transform_3(%arg0: i32, %arg1: i32) -> (i32, i32) {
    %c0_i32 = arith.constant 0 : i32
    %c0_i32_0 = arith.constant 0 : i32
    return %arg1, %c0_i32 : i32, i32
  }
  func.func @transform_4(%arg0: i32, %arg1: i32) -> (i32, i32) {
    %c0_i32 = arith.constant 0 : i32
    %c0_i32_0 = arith.constant 0 : i32
    %c0_i32_1 = arith.constant 0 : i32
    return %c0_i32, %c0_i32_0 : i32, i32
  }
  func.func @transform_5(%arg0: i32, %arg1: i32) -> (i32, i32) {
    %c0_i32 = arith.constant 0 : i32
    %c0_i32_0 = arith.constant 0 : i32
    return %arg0, %c0_i32 : i32, i32
  }
}

module attributes {stable_mosaic.version = 11 : i64} {
  func.func @ffn_kernel(%arg0: i32, %arg1: i32, %arg2: memref<16x128xbf16, #tpu.memory_space<vmem>>, %arg3: memref<128x128xbf16, #tpu.memory_space<vmem>>, %arg4: memref<1x128xf32, #tpu.memory_space<vmem>>, %arg5: memref<128x128xbf16, #tpu.memory_space<vmem>>, %arg6: memref<1x128xf32, #tpu.memory_space<vmem>>, %arg7: memref<16x128xf32, #tpu.memory_space<vmem>>, %arg8: memref<16x128xf32, #tpu.memory_space<vmem>>) attributes {dimension_semantics = [#tpu.dimension_semantics<parallel>, #tpu.dimension_semantics<arbitrary>], iteration_bounds = array<i64: 1, 1>, scalar_prefetch = 0 : i64, scratch_operands = 1 : i64, tpu.core_type = #tpu.core_type<tc>, window_params = [{transform_indices = @transform_0, window_bounds = array<i64: 16, 128>}, {transform_indices = @transform_1, window_bounds = array<i64: 128, 128>}, {transform_indices = @transform_2, window_bounds = array<i64: 1, 128>}, {transform_indices = @transform_3, window_bounds = array<i64: 128, 128>}, {pipeline_mode = #tpu.pipeline_mode<synchronous>, transform_indices = @transform_4, window_bounds = array<i64: 1, 128>}, {transform_indices = @transform_5, window_bounds = array<i64: 16, 128>}]} {
    %c0_i32 = arith.constant 0 : i32
    %0 = arith.cmpi eq, %arg1, %c0_i32 : i32
    %1 = arith.extui %0 : i1 to i32
    %c0_i32_0 = arith.constant 0 : i32
    %2 = arith.cmpi ne, %1, %c0_i32_0 : i32
    scf.if %2 {
      %c0_16 = arith.constant 0 : index
      %c0_17 = arith.constant 0 : index
      %20 = vector.load %arg6[%c0_16, %c0_17] : memref<1x128xf32, #tpu.memory_space<vmem>>, vector<1x128xf32>
      %21 = vector.shape_cast %20 : vector<1x128xf32> to vector<1x128xf32>
      %22 = vector.broadcast %21 : vector<1x128xf32> to vector<16x128xf32>
      %c0_18 = arith.constant 0 : index
      %c0_19 = arith.constant 0 : index
      %23 = vector.load %arg8[%c0_18, %c0_19] : memref<16x128xf32, #tpu.memory_space<vmem>>, vector<16x128xf32>
      tpu.vector_store %arg8[%c0_18, %c0_19], %22 {strides = array<i32>} : memref<16x128xf32, #tpu.memory_space<vmem>>, vector<16x128xf32>,
    } else {
    }
    %c0 = arith.constant 0 : index
    %c0_1 = arith.constant 0 : index
    %3 = vector.load %arg2[%c0, %c0_1] : memref<16x128xbf16, #tpu.memory_space<vmem>>, vector<16x128xbf16>
    %c0_2 = arith.constant 0 : index
    %c0_3 = arith.constant 0 : index
    %4 = vector.load %arg3[%c0_2, %c0_3] : memref<128x128xbf16, #tpu.memory_space<vmem>>, vector<128x128xbf16>
    %cst = arith.constant dense<0.000000e+00> : vector<16x128xf32>
    %5 = tpu.matmul %3, %4, %cst {dimension_numbers = #tpu.dot_dimension_numbers<[1], [0], [0], [1], [0, 0, 1, 1], [], []>} : vector<16x128xbf16>, vector<128x128xbf16>, vector<16x128xf32> -> vector<16x128xf32>
    %c0_4 = arith.constant 0 : index
    %c0_5 = arith.constant 0 : index
    %6 = vector.load %arg4[%c0_4, %c0_5] : memref<1x128xf32, #tpu.memory_space<vmem>>, vector<1x128xf32>
    %7 = vector.broadcast %6 : vector<1x128xf32> to vector<16x128xf32>
    %8 = arith.addf %5, %7 : vector<16x128xf32>
    %cst_6 = arith.constant 0.000000e+00 : f32
    %9 = vector.broadcast %cst_6 : f32 to vector<16x128xf32>
    %10 = arith.maximumf %8, %9 : vector<16x128xf32>
    %c0_7 = arith.constant 0 : index
    %c0_8 = arith.constant 0 : index
    %11 = vector.load %arg8[%c0_7, %c0_8] : memref<16x128xf32, #tpu.memory_space<vmem>>, vector<16x128xf32>
    %12 = arith.truncf %10 : vector<16x128xf32> to vector<16x128xbf16>
    %c0_9 = arith.constant 0 : index
    %c0_10 = arith.constant 0 : index
    %13 = vector.load %arg5[%c0_9, %c0_10] : memref<128x128xbf16, #tpu.memory_space<vmem>>, vector<128x128xbf16>
    %cst_11 = arith.constant dense<0.000000e+00> : vector<16x128xf32>
    %14 = tpu.matmul %12, %13, %cst_11 {dimension_numbers = #tpu.dot_dimension_numbers<[1], [0], [0], [1], [0, 0, 1, 1], [], []>} : vector<16x128xbf16>, vector<128x128xbf16>, vector<16x128xf32> -> vector<16x128xf32>
    %15 = arith.addf %11, %14 : vector<16x128xf32>
    %c0_12 = arith.constant 0 : index
    %c0_13 = arith.constant 0 : index
    %16 = vector.load %arg8[%c0_12, %c0_13] : memref<16x128xf32, #tpu.memory_space<vmem>>, vector<16x128xf32>
    tpu.vector_store %arg8[%c0_12, %c0_13], %15 {strides = array<i32>} : memref<16x128xf32, #tpu.memory_space<vmem>>, vector<16x128xf32>,
    %c0_i32_14 = arith.constant 0 : i32
    %17 = arith.cmpi eq, %arg1, %c0_i32_14 : i32
    %18 = arith.extui %17 : i1 to i32
    %c0_i32_15 = arith.constant 0 : i32
    %19 = arith.cmpi ne, %18, %c0_i32_15 : i32
    scf.if %19 {
      %c0_16 = arith.constant 0 : index
      %c0_17 = arith.constant 0 : index
      %20 = vector.load %arg8[%c0_16, %c0_17] : memref<16x128xf32, #tpu.memory_space<vmem>>, vector<16x128xf32>
      %c0_18 = arith.constant 0 : index
      %c0_19 = arith.constant 0 : index
      %21 = vector.load %arg7[%c0_18, %c0_19] : memref<16x128xf32, #tpu.memory_space<vmem>>, vector<16x128xf32>
      tpu.vector_store %arg7[%c0_18, %c0_19], %20 {strides = array<i32>} : memref<16x128xf32, #tpu.memory_space<vmem>>, vector<16x128xf32>,
    } else {
    }
    return
  }
  func.func @transform_0(%arg0: i32, %arg1: i32) -> (i32, i32) {
    %c0_i32 = arith.constant 0 : i32
    %c0_i32_0 = arith.constant 0 : i32
    return %arg0, %c0_i32 : i32, i32
  }
  func.func @transform_1(%arg0: i32, %arg1: i32) -> (i32, i32) {
    %c0_i32 = arith.constant 0 : i32
    %c0_i32_0 = arith.constant 0 : i32
    return %c0_i32, %arg1 : i32, i32
  }
  func.func @transform_2(%arg0: i32, %arg1: i32) -> (i32, i32) {
    %c0_i32 = arith.constant 0 : i32
    %c0_i32_0 = arith.constant 0 : i32
    return %c0_i32, %arg1 : i32, i32
  }
  func.func @transform_3(%arg0: i32, %arg1: i32) -> (i32, i32) {
    %c0_i32 = arith.constant 0 : i32
    %c0_i32_0 = arith.constant 0 : i32
    return %arg1, %c0_i32 : i32, i32
  }
  func.func @transform_4(%arg0: i32, %arg1: i32) -> (i32, i32) {
    %c0_i32 = arith.constant 0 : i32
    %c0_i32_0 = arith.constant 0 : i32
    %c0_i32_1 = arith.constant 0 : i32
    return %c0_i32, %c0_i32_0 : i32, i32
  }
  func.func @transform_5(%arg0: i32, %arg1: i32) -> (i32, i32) {
    %c0_i32 = arith.constant 0 : i32
    %c0_i32_0 = arith.constant 0 : i32
    return %arg0, %c0_i32 : i32, i32
  }
}

</mosaic_0001>

<llo_original>
// kernel: tpu_custom_call.1
$region0: #{tpu_custom_call.1}
  #allocation0 [shape = 'u32[]', space=smem, size = 0x4, offset = 0x4, fixed_abs, tag = 'smem constant byte address 0x4 - core index']
  #allocation1 [shape = 'u32[144,128]{1,0:T(1,128)}', space=vmem, size = 0x12000, scoped, tag = 'internal scratch']
  #allocation2 [shape = 'f32[16,128]{1,0:T(8,128)}', space=vmem, size = 0x2000, scoped, tag = 'scratch operand']
  %s0 = inlined_call_operand.hbm [shape: bf16[16,128], index: 0, kind: input, shape index: {}]
  %s1 = inlined_call_operand.hbm [shape: bf16[128,128], index: 1, kind: input, shape index: {}]
  %s2 = inlined_call_operand.vmem [shape: f32[1,128], index: 2, kind: input, shape index: {}]
  %s3 = inlined_call_operand.hbm [shape: bf16[128,128], index: 3, kind: input, shape index: {}]
  %s4 = inlined_call_operand.vmem [shape: f32[1,128], index: 4, kind: input, shape index: {}]
  %s5 = inlined_call_operand.hbm [shape: f32[16,128], index: 5, kind: output, shape index: {}]
  %s6 = sld [smem:[#allocation0]]
  $region50: #{tpu_custom_call.1} parent=0
    _
  %s8 = ssub.s32 1, %s6
  %s9 = scalar_select 0, %s8, %s6
  $region1: #{tpu_custom_call.1} parent=0
    #allocation3 [shape = 'u8[4096]{0}', space=vmem, size = 0x1000, scoped, tag = 'input window, operand 0, single buffered']
    #allocation4 [shape = 's32[1]{0}', space=sflag, size = 0x4, scoped, tag = 'scoped memory for tpu_custom_call.1']
    #allocation5 [shape = 's32[1]{0}', space=sflag, size = 0x4, scoped, tag = 'scoped memory for tpu_custom_call.1']
    #allocation6 [shape = 'u8[32768]{0}', space=vmem, size = 0x8000, scoped, tag = 'input window, operand 1, single buffered']
    #allocation7 [shape = 's32[1]{0}', space=sflag, size = 0x4, scoped, tag = 'scoped memory for tpu_custom_call.1']
    #allocation8 [shape = 'u8[32768]{0}', space=vmem, size = 0x8000, scoped, tag = 'input window, operand 3, single buffered']
    #allocation9 [shape = 'u8[8192]{0}', space=vmem, size = 0x2000, scoped, tag = 'output window, operand 0, single buffered']
    %10 = vsyncpa [#allocation4], 0
    %11 = vsyncpa [#allocation7], 0
    %12 = vsyncpa [#allocation5], 0
    // Predicated region
    $region2: #{tpu_custom_call.1} parent=1 // pred_check
      _
    $region3: #{tpu_custom_call.1} parent=1 // pred_check_branch
      %14 = sbr.rel (0) target = $region5
    $region4: #{tpu_custom_call.1} parent=1 // pred_region
      %s16 = ssub.s32 128, 128
      %17 = vsyncadd [#allocation4], %s16
      %s18 = sshll.u32 [#allocation3], 4
      %s19 = int_to_ptr.vmem [resolvable:$true] %s18
      %24 = dma.hbm_to_vmem [thread:$0]  %s0, 128, %s19, [#allocation4], 64, 64, 4
    $region5: #{tpu_custom_call.1} parent=1 // pred_fallthru
      _
    // Predicated region
    $region6: #{tpu_custom_call.1} parent=1 // pred_check
      _
    $region7: #{tpu_custom_call.1} parent=1 // pred_check_branch
      %26 = sbr.rel (0) target = $region9
    $region8: #{tpu_custom_call.1} parent=1 // pred_region
      %s28 = ssub.s32 1024, 1024
      %29 = vsyncadd [#allocation7], %s28
      %s30 = sshll.u32 [#allocation6], 4
      %s31 = int_to_ptr.vmem [resolvable:$true] %s30
      %36 = dma.hbm_to_vmem [thread:$0]  %s1, 1024, %s31, [#allocation7], 64, 64, 4
    $region9: #{tpu_custom_call.1} parent=1 // pred_fallthru
      _
    // Predicated region
    $region10: #{tpu_custom_call.1} parent=1 // pred_check
      _
    $region11: #{tpu_custom_call.1} parent=1 // pred_check_branch
      %38 = sbr.rel (0) target = $region13
    $region12: #{tpu_custom_call.1} parent=1 // pred_region
      _
    $region13: #{tpu_custom_call.1} parent=1 // pred_fallthru
      _
    // Predicated region
    $region14: #{tpu_custom_call.1} parent=1 // pred_check
      _
    $region15: #{tpu_custom_call.1} parent=1 // pred_check_branch
      %40 = sbr.rel (0) target = $region17
    $region16: #{tpu_custom_call.1} parent=1 // pred_region
      %s42 = ssub.s32 1024, 1024
      %43 = vsyncadd [#allocation7], %s42
      %s44 = sshll.u32 [#allocation8], 4
      %s45 = int_to_ptr.vmem [resolvable:$true] %s44
      %50 = dma.hbm_to_vmem [thread:$0]  %s3, 1024, %s45, [#allocation7], 64, 64, 4
    $region17: #{tpu_custom_call.1} parent=1 // pred_fallthru
      _
    // Predicated region
    $region18: #{tpu_custom_call.1} parent=1 // pred_check
      _
    $region19: #{tpu_custom_call.1} parent=1 // pred_check_branch
      %52 = sbr.rel (0) target = $region21
    $region20: #{tpu_custom_call.1} parent=1 // pred_region
      _
    $region21: #{tpu_custom_call.1} parent=1 // pred_fallthru
      _
    // Predicated region
    $region22: #{tpu_custom_call.1} parent=1 // pred_check
      _
    $region23: #{tpu_custom_call.1} parent=1 // pred_check_branch
      %54 = sbr.rel (0) target = $region25
    $region24: #{tpu_custom_call.1} parent=1 // pred_region
      %55 = dma.done [#allocation4], 128
    $region25: #{tpu_custom_call.1} parent=1 // pred_fallthru
      _
    // Predicated region
    $region26: #{tpu_custom_call.1} parent=1 // pred_check
      _
    $region27: #{tpu_custom_call.1} parent=1 // pred_check_branch
      %57 = sbr.rel (0) target = $region29
    $region28: #{tpu_custom_call.1} parent=1 // pred_region
      %58 = dma.done [#allocation7], 1024
    $region29: #{tpu_custom_call.1} parent=1 // pred_fallthru
      _
    // Predicated region
    $region30: #{tpu_custom_call.1} parent=1 // pred_check
      _
    $region31: #{tpu_custom_call.1} parent=1 // pred_check_branch
      %60 = sbr.rel (0) target = $region33
    $region32: #{tpu_custom_call.1} parent=1 // pred_region
      %61 = dma.done [#allocation7], 1024
    $region33: #{tpu_custom_call.1} parent=1 // pred_fallthru
      _
    %p63 = scmp.eq.s32.totalorder 0, 0
    // Predicated region
    $region34: #{tpu_custom_call.1} parent=1 // pred_check
      %p64 = pneg %p63
    $region35: #{tpu_custom_call.1} parent=1 // pred_check_branch
      %66 = sbr.rel (%p64) target = $region37
    $region36: #{tpu_custom_call.1} parent=1 // pred_region
      %v67 = vld [vmem:[%s4] sm:$0x1]
      %v69 = vlaneseq
      %v70 = vshrl.u32 %v69, 7
      %v71 = vsub.s32 0, %v70
      %v72 = vrot.slane %v67, %v71
      %74 = vst [vmem:[#allocation2] sm:$0xff] %v72
      %75 = vst [vmem:[#allocation2 + $0x8] sm:$0xff] %v72
    $region37: #{tpu_custom_call.1} parent=1 // pred_fallthru
      _
    %v76 = vld [vmem:[#allocation3] sm:$0xf]
    %v77 = vld [vmem:[#allocation3 + $0x4] sm:$0xf]
    %v78 = vld [vmem:[#allocation6] sm:$0xf]
    %v79 = vld [vmem:[#allocation6 + $0x4] sm:$0xf]
    %v80 = vld [vmem:[#allocation6 + $0x8] sm:$0xf]
    %v81 = vld [vmem:[#allocation6 + $0xc] sm:$0xf]
    %v82 = vld [vmem:[#allocation6 + $0x10] sm:$0xf]
    %v83 = vld [vmem:[#allocation6 + $0x14] sm:$0xf]
    %v84 = vld [vmem:[#allocation6 + $0x18] sm:$0xf]
    %v85 = vld [vmem:[#allocation6 + $0x1c] sm:$0xf]
    %v86 = vld [vmem:[#allocation6 + $0x20] sm:$0xf]
    %v87 = vld [vmem:[#allocation6 + $0x24] sm:$0xf]
    %v88 = vld [vmem:[#allocation6 + $0x28] sm:$0xf]
    %v89 = vld [vmem:[#allocation6 + $0x2c] sm:$0xf]
    %v90 = vld [vmem:[#allocation6 + $0x30] sm:$0xf]
    %v91 = vld [vmem:[#allocation6 + $0x34] sm:$0xf]
    %v92 = vld [vmem:[#allocation6 + $0x38] sm:$0xf]
    %v93 = vld [vmem:[#allocation6 + $0x3c] sm:$0xf]
    %v94 = vld [vmem:[%s2] sm:$0x1]
    %v96 = vlaneseq
    %v97 = vshrl.u32 %v96, 7
    %v98 = vsub.s32 0, %v97
    %v99 = vrot.slane %v94, %v98
    %v103 = vunpack.c.l.b16 %v76
    %v104 = vunpack.c.l.b16 %v77
    %v105 = vpack.c.b16 %v104, %v103
    %v123 = vunpack.c.l.b16 %v78
    %v124 = vunpack.c.l.b16 %v79
    %v125 = vunpack.c.l.b16 %v80
    %v126 = vunpack.c.l.b16 %v81
    %v127 = vunpack.c.l.b16 %v82
    %v128 = vunpack.c.l.b16 %v83
    %v129 = vunpack.c.l.b16 %v84
    %v130 = vunpack.c.l.b16 %v85
    %v131 = vunpack.c.l.b16 %v86
    %v132 = vunpack.c.l.b16 %v87
    %v133 = vunpack.c.l.b16 %v88
    %v134 = vunpack.c.l.b16 %v89
    %v135 = vunpack.c.l.b16 %v90
    %v136 = vunpack.c.l.b16 %v91
    %v137 = vunpack.c.l.b16 %v92
    %v138 = vunpack.c.l.b16 %v93
    %v139 = vpack.c.b16 %v124, %v123
    %v140 = vpack.c.b16 %v126, %v125
    %v141 = vpack.c.b16 %v128, %v127
    %v142 = vpack.c.b16 %v130, %v129
    %v143 = vpack.c.b16 %v132, %v131
    %v144 = vpack.c.b16 %v134, %v133
    %v145 = vpack.c.b16 %v136, %v135
    %v146 = vpack.c.b16 %v138, %v137
    %155 = vmatprep.subr.bf16.mxu0 0
    %156 = vmatpush1.bf16.msra.mxu0 %v146
    %157 = vmatprep.subr.bf16.mxu0 0
    %158 = vmatpush1.bf16.msra.mxu0 %v145
    %159 = vmatprep.subr.bf16.mxu0 0
    %160 = vmatpush1.bf16.msra.mxu0 %v144
    %161 = vmatprep.subr.bf16.mxu0 0
    %162 = vmatpush1.bf16.msra.mxu0 %v143
    %163 = vmatprep.subr.bf16.mxu0 0
    %164 = vmatpush1.bf16.msra.mxu0 %v142
    %165 = vmatprep.subr.bf16.mxu0 0
    %166 = vmatpush1.bf16.msra.mxu0 %v141
    %167 = vmatprep.subr.bf16.mxu0 0
    %168 = vmatpush1.bf16.msra.mxu0 %v140
    %169 = vmatprep.subr.bf16.mxu0 0
    %170 = vmatpush1.bf16.msra.mxu0 %v139
    %171 = vmatprep.subr.bf16.mxu0 0
    %172 = vmatpush2.bf16.msra.mxu0 0
    %173 = vmatprep.subr.bf16.mxu0 0
    %174 = vmatpush2.bf16.msra.mxu0 0
    %175 = vmatprep.subr.bf16.mxu0 0
    %176 = vmatpush2.bf16.msra.mxu0 0
    %177 = vmatprep.subr.bf16.mxu0 0
    %178 = vmatpush2.bf16.msra.mxu0 0
    %179 = vmatprep.subr.bf16.mxu0 0
    %180 = vmatpush2.bf16.msra.mxu0 0
    %181 = vmatprep.subr.bf16.mxu0 0
    %182 = vmatpush2.bf16.msra.mxu0 0
    %183 = vmatprep.subr.bf16.mxu0 0
    %184 = vmatpush2.bf16.msra.mxu0 0
    %185 = vmatprep.subr.bf16.mxu0 0
    %186 = vmatpush2.bf16.msra.mxu0 0
    %187 = vmatprep.mubr.bf16.mxu0 0
    %188 = vmatmul.mubr.bf16.gmra.mxu0 %v105
    %v189 = vpop.f32.mrf.mxu0
    %v190 = vadd.f32 %v99, %v189
    %v191 = vpop.f32.mrf.mxu0
    %v192 = vpop.f32.mrf.mxu0
    %v193 = vadd.f32 %v99, %v192
    %v194 = vpop.f32.mrf.mxu0
    %195 = vdwg.mxu0
    %v196 = vmax.f32 %v190, 0.0
    %v197 = vmax.f32 %v193, 0.0
    %v198 = vld [vmem:[#allocation2] sm:$0xff]
    %v199 = vld [vmem:[#allocation2 + $0x8] sm:$0xff]
    %v200 = vpack.c.bf16 %v197, %v196
    %v201 = vld [vmem:[#allocation8] sm:$0xf]
    %v202 = vld [vmem:[#allocation8 + $0x4] sm:$0xf]
    %v203 = vld [vmem:[#allocation8 + $0x8] sm:$0xf]
    %v204 = vld [vmem:[#allocation8 + $0xc] sm:$0xf]
    %v205 = vld [vmem:[#allocation8 + $0x10] sm:$0xf]
    %v206 = vld [vmem:[#allocation8 + $0x14] sm:$0xf]
    %v207 = vld [vmem:[#allocation8 + $0x18] sm:$0xf]
    %v208 = vld [vmem:[#allocation8 + $0x1c] sm:$0xf]
    %v209 = vld [vmem:[#allocation8 + $0x20] sm:$0xf]
    %v210 = vld [vmem:[#allocation8 + $0x24] sm:$0xf]
    %v211 = vld [vmem:[#allocation8 + $0x28] sm:$0xf]
    %v212 = vld [vmem:[#allocation8 + $0x2c] sm:$0xf]
    %v213 = vld [vmem:[#allocation8 + $0x30] sm:$0xf]
    %v214 = vld [vmem:[#allocation8 + $0x34] sm:$0xf]
    %v215 = vld [vmem:[#allocation8 + $0x38] sm:$0xf]
    %v216 = vld [vmem:[#allocation8 + $0x3c] sm:$0xf]
    %v233 = vunpack.c.l.b16 %v201
    %v234 = vunpack.c.l.b16 %v202
    %v235 = vunpack.c.l.b16 %v203
    %v236 = vunpack.c.l.b16 %v204
    %v237 = vunpack.c.l.b16 %v205
    %v238 = vunpack.c.l.b16 %v206
    %v239 = vunpack.c.l.b16 %v207
    %v240 = vunpack.c.l.b16 %v208
    %v241 = vunpack.c.l.b16 %v209
    %v242 = vunpack.c.l.b16 %v210
    %v243 = vunpack.c.l.b16 %v211
    %v244 = vunpack.c.l.b16 %v212
    %v245 = vunpack.c.l.b16 %v213
    %v246 = vunpack.c.l.b16 %v214
    %v247 = vunpack.c.l.b16 %v215
    %v248 = vunpack.c.l.b16 %v216
    %v249 = vpack.c.b16 %v234, %v233
    %v250 = vpack.c.b16 %v236, %v235
    %v251 = vpack.c.b16 %v238, %v237
    %v252 = vpack.c.b16 %v240, %v239
    %v253 = vpack.c.b16 %v242, %v241
    %v254 = vpack.c.b16 %v244, %v243
    %v255 = vpack.c.b16 %v246, %v245
    %v256 = vpack.c.b16 %v248, %v247
    %265 = vmatprep.subr.bf16.mxu0 0
    %266 = vmatpush1.bf16.msra.mxu0 %v256
    %267 = vmatprep.subr.bf16.mxu0 0
    %268 = vmatpush1.bf16.msra.mxu0 %v255
    %269 = vmatprep.subr.bf16.mxu0 0
    %270 = vmatpush1.bf16.msra.mxu0 %v254
    %271 = vmatprep.subr.bf16.mxu0 0
    %272 = vmatpush1.bf16.msra.mxu0 %v253
    %273 = vmatprep.subr.bf16.mxu0 0
    %274 = vmatpush1.bf16.msra.mxu0 %v252
    %275 = vmatprep.subr.bf16.mxu0 0
    %276 = vmatpush1.bf16.msra.mxu0 %v251
    %277 = vmatprep.subr.bf16.mxu0 0
    %278 = vmatpush1.bf16.msra.mxu0 %v250
    %279 = vmatprep.subr.bf16.mxu0 0
    %280 = vmatpush1.bf16.msra.mxu0 %v249
    %281 = vmatprep.subr.bf16.mxu0 0
    %282 = vmatpush2.bf16.msra.mxu0 0
    %283 = vmatprep.subr.bf16.mxu0 0
    %284 = vmatpush2.bf16.msra.mxu0 0
    %285 = vmatprep.subr.bf16.mxu0 0
    %286 = vmatpush2.bf16.msra.mxu0 0
    %287 = vmatprep.subr.bf16.mxu0 0
    %288 = vmatpush2.bf16.msra.mxu0 0
    %289 = vmatprep.subr.bf16.mxu0 0
    %290 = vmatpush2.bf16.msra.mxu0 0
    %291 = vmatprep.subr.bf16.mxu0 0
    %292 = vmatpush2.bf16.msra.mxu0 0
    %293 = vmatprep.subr.bf16.mxu0 0
    %294 = vmatpush2.bf16.msra.mxu0 0
    %295 = vmatprep.subr.bf16.mxu0 0
    %296 = vmatpush2.bf16.msra.mxu0 0
    %297 = vmatprep.mubr.bf16.mxu0 0
    %298 = vmatmul.mubr.bf16.gmra.mxu0 %v200
    %v299 = vpop.f32.mrf.mxu0
    %v300 = vadd.f32 0.0, %v299
    %v301 = vpop.f32.mrf.mxu0
    %v302 = vpop.f32.mrf.mxu0
    %v303 = vadd.f32 0.0, %v302
    %v304 = vpop.f32.mrf.mxu0
    %305 = vdwg.mxu0
    %v306 = vadd.f32 %v198, %v300
    %v307 = vadd.f32 %v199, %v303
    %308 = vst [vmem:[#allocation2] sm:$0xff] %v306
    %309 = vst [vmem:[#allocation2 + $0x8] sm:$0xff] %v307
    // Predicated region
    $region38: #{tpu_custom_call.1} parent=1 // pred_check
      %p310 = pneg %p63
    $region39: #{tpu_custom_call.1} parent=1 // pred_check_branch
      %312 = sbr.rel (%p310) target = $region41
    $region40: #{tpu_custom_call.1} parent=1 // pred_region
      %v313 = vld [vmem:[#allocation2] sm:$0xff]
      %v314 = vld [vmem:[#allocation2 + $0x8] sm:$0xff]
      %315 = vst [vmem:[#allocation9] sm:$0xff] %v313
      %316 = vst [vmem:[#allocation9 + $0x8] sm:$0xff] %v314
    $region41: #{tpu_custom_call.1} parent=1 // pred_fallthru
      _
    // Predicated region
    $region42: #{tpu_custom_call.1} parent=1 // pred_check
      _
    $region43: #{tpu_custom_call.1} parent=1 // pred_check_branch
      %318 = sbr.rel (0) target = $region45
    $region44: #{tpu_custom_call.1} parent=1 // pred_region
      %s320 = ssub.s32 256, 256
      %321 = vsyncadd [#allocation5], %s320
      %s322 = sshll.u32 [#allocation9], 4
      %s323 = int_to_ptr.vmem [resolvable:$true] %s322
      %328 = dma.vmem_to_hbm [thread:$0]  %s323, 256, %s5, [#allocation5], 128, 128, 8
    $region45: #{tpu_custom_call.1} parent=1 // pred_fallthru
      _
    // Predicated region
    $region46: #{tpu_custom_call.1} parent=1 // pred_check
      _
    $region47: #{tpu_custom_call.1} parent=1 // pred_check_branch
      %330 = sbr.rel (0) target = $region49
    $region48: #{tpu_custom_call.1} parent=1 // pred_region
      %331 = dma.done [#allocation5], 256
    $region49: #{tpu_custom_call.1} parent=1 // pred_fallthru
      _
    %332 = vsyncpa [#allocation4], 1
    %333 = vsyncpa [#allocation7], 1
    %334 = vsyncpa [#allocation5], 1

// kernel: tpu_custom_call.1
$region0: #{tpu_custom_call.1}
  #allocation0 [shape = 'u32[]', space=smem, size = 0x4, offset = 0x4, fixed_abs, tag = 'smem constant byte address 0x4 - core index']
  #allocation1 [shape = 'u32[144,128]{1,0:T(1,128)}', space=vmem, size = 0x12000, scoped, tag = 'internal scratch']
  #allocation2 [shape = 'f32[16,128]{1,0:T(8,128)}', space=vmem, size = 0x2000, scoped, tag = 'scratch operand']
  %s0 = inlined_call_operand.hbm [shape: bf16[16,128], index: 0, kind: input, shape index: {}]
  %s1 = inlined_call_operand.hbm [shape: bf16[128,128], index: 1, kind: input, shape index: {}]
  %s2 = inlined_call_operand.vmem [shape: f32[1,128], index: 2, kind: input, shape index: {}]
  %s3 = inlined_call_operand.hbm [shape: bf16[128,128], index: 3, kind: input, shape index: {}]
  %s4 = inlined_call_operand.vmem [shape: f32[1,128], index: 4, kind: input, shape index: {}]
  %s5 = inlined_call_operand.hbm [shape: f32[16,128], index: 5, kind: output, shape index: {}]
  %s6 = sld [smem:[#allocation0]]
  $region50: #{tpu_custom_call.1} parent=0
    _
  %s8 = ssub.s32 1, %s6
  %s9 = scalar_select 0, %s8, %s6
  $region1: #{tpu_custom_call.1} parent=0
    #allocation3 [shape = 'u8[4096]{0}', space=vmem, size = 0x1000, scoped, tag = 'input window, operand 0, single buffered']
    #allocation4 [shape = 's32[1]{0}', space=sflag, size = 0x4, scoped, tag = 'scoped memory for tpu_custom_call.1']
    #allocation5 [shape = 's32[1]{0}', space=sflag, size = 0x4, scoped, tag = 'scoped memory for tpu_custom_call.1']
    #allocation6 [shape = 'u8[32768]{0}', space=vmem, size = 0x8000, scoped, tag = 'input window, operand 1, single buffered']
    #allocation7 [shape = 's32[1]{0}', space=sflag, size = 0x4, scoped, tag = 'scoped memory for tpu_custom_call.1']
    #allocation8 [shape = 'u8[32768]{0}', space=vmem, size = 0x8000, scoped, tag = 'input window, operand 3, single buffered']
    #allocation9 [shape = 'u8[8192]{0}', space=vmem, size = 0x2000, scoped, tag = 'output window, operand 0, single buffered']
    %10 = vsyncpa [#allocation4], 0
    %11 = vsyncpa [#allocation7], 0
    %12 = vsyncpa [#allocation5], 0
    // Predicated region
    $region2: #{tpu_custom_call.1} parent=1 // pred_check
      _
    $region3: #{tpu_custom_call.1} parent=1 // pred_check_branch
      %14 = sbr.rel (0) target = $region5
    $region4: #{tpu_custom_call.1} parent=1 // pred_region
      %s16 = ssub.s32 128, 128
      %17 = vsyncadd [#allocation4], %s16
      %s18 = sshll.u32 [#allocation3], 4
      %s19 = int_to_ptr.vmem [resolvable:$true] %s18
      %24 = dma.hbm_to_vmem [thread:$0]  %s0, 128, %s19, [#allocation4], 64, 64, 4
    $region5: #{tpu_custom_call.1} parent=1 // pred_fallthru
      _
    // Predicated region
    $region6: #{tpu_custom_call.1} parent=1 // pred_check
      _
    $region7: #{tpu_custom_call.1} parent=1 // pred_check_branch
      %26 = sbr.rel (0) target = $region9
    $region8: #{tpu_custom_call.1} parent=1 // pred_region
      %s28 = ssub.s32 1024, 1024
      %29 = vsyncadd [#allocation7], %s28
      %s30 = sshll.u32 [#allocation6], 4
      %s31 = int_to_ptr.vmem [resolvable:$true] %s30
      %36 = dma.hbm_to_vmem [thread:$0]  %s1, 1024, %s31, [#allocation7], 64, 64, 4
    $region9: #{tpu_custom_call.1} parent=1 // pred_fallthru
      _
    // Predicated region
    $region10: #{tpu_custom_call.1} parent=1 // pred_check
      _
    $region11: #{tpu_custom_call.1} parent=1 // pred_check_branch
      %38 = sbr.rel (0) target = $region13
    $region12: #{tpu_custom_call.1} parent=1 // pred_region
      _
    $region13: #{tpu_custom_call.1} parent=1 // pred_fallthru
      _
    // Predicated region
    $region14: #{tpu_custom_call.1} parent=1 // pred_check
      _
    $region15: #{tpu_custom_call.1} parent=1 // pred_check_branch
      %40 = sbr.rel (0) target = $region17
    $region16: #{tpu_custom_call.1} parent=1 // pred_region
      %s42 = ssub.s32 1024, 1024
      %43 = vsyncadd [#allocation7], %s42
      %s44 = sshll.u32 [#allocation8], 4
      %s45 = int_to_ptr.vmem [resolvable:$true] %s44
      %50 = dma.hbm_to_vmem [thread:$0]  %s3, 1024, %s45, [#allocation7], 64, 64, 4
    $region17: #{tpu_custom_call.1} parent=1 // pred_fallthru
      _
    // Predicated region
    $region18: #{tpu_custom_call.1} parent=1 // pred_check
      _
    $region19: #{tpu_custom_call.1} parent=1 // pred_check_branch
      %52 = sbr.rel (0) target = $region21
    $region20: #{tpu_custom_call.1} parent=1 // pred_region
      _
    $region21: #{tpu_custom_call.1} parent=1 // pred_fallthru
      _
    // Predicated region
    $region22: #{tpu_custom_call.1} parent=1 // pred_check
      _
    $region23: #{tpu_custom_call.1} parent=1 // pred_check_branch
      %54 = sbr.rel (0) target = $region25
    $region24: #{tpu_custom_call.1} parent=1 // pred_region
      %55 = dma.done [#allocation4], 128
    $region25: #{tpu_custom_call.1} parent=1 // pred_fallthru
      _
    // Predicated region
    $region26: #{tpu_custom_call.1} parent=1 // pred_check
      _
    $region27: #{tpu_custom_call.1} parent=1 // pred_check_branch
      %57 = sbr.rel (0) target = $region29
    $region28: #{tpu_custom_call.1} parent=1 // pred_region
      %58 = dma.done [#allocation7], 1024
    $region29: #{tpu_custom_call.1} parent=1 // pred_fallthru
      _
    // Predicated region
    $region30: #{tpu_custom_call.1} parent=1 // pred_check
      _
    $region31: #{tpu_custom_call.1} parent=1 // pred_check_branch
      %60 = sbr.rel (0) target = $region33
    $region32: #{tpu_custom_call.1} parent=1 // pred_region
      %61 = dma.done [#allocation7], 1024
    $region33: #{tpu_custom_call.1} parent=1 // pred_fallthru
      _
    %p63 = scmp.eq.s32.totalorder 0, 0
    // Predicated region
    $region34: #{tpu_custom_call.1} parent=1 // pred_check
      %p64 = pneg %p63
    $region35: #{tpu_custom_call.1} parent=1 // pred_check_branch
      %66 = sbr.rel (%p64) target = $region37
    $region36: #{tpu_custom_call.1} parent=1 // pred_region
      %v67 = vld [vmem:[%s4] sm:$0x1]
      %v69 = vlaneseq
      %v70 = vshrl.u32 %v69, 7
      %v71 = vsub.s32 0, %v70
      %v72 = vrot.slane %v67, %v71
      %74 = vst [vmem:[#allocation2] sm:$0xff] %v72
      %75 = vst [vmem:[#allocation2 + $0x8] sm:$0xff] %v72
    $region37: #{tpu_custom_call.1} parent=1 // pred_fallthru
      _
    %v76 = vld [vmem:[#allocation3] sm:$0xf]
    %v77 = vld [vmem:[#allocation3 + $0x4] sm:$0xf]
    %v78 = vld [vmem:[#allocation6] sm:$0xf]
    %v79 = vld [vmem:[#allocation6 + $0x4] sm:$0xf]
    %v80 = vld [vmem:[#allocation6 + $0x8] sm:$0xf]
    %v81 = vld [vmem:[#allocation6 + $0xc] sm:$0xf]
    %v82 = vld [vmem:[#allocation6 + $0x10] sm:$0xf]
    %v83 = vld [vmem:[#allocation6 + $0x14] sm:$0xf]
    %v84 = vld [vmem:[#allocation6 + $0x18] sm:$0xf]
    %v85 = vld [vmem:[#allocation6 + $0x1c] sm:$0xf]
    %v86 = vld [vmem:[#allocation6 + $0x20] sm:$0xf]
    %v87 = vld [vmem:[#allocation6 + $0x24] sm:$0xf]
    %v88 = vld [vmem:[#allocation6 + $0x28] sm:$0xf]
    %v89 = vld [vmem:[#allocation6 + $0x2c] sm:$0xf]
    %v90 = vld [vmem:[#allocation6 + $0x30] sm:$0xf]
    %v91 = vld [vmem:[#allocation6 + $0x34] sm:$0xf]
    %v92 = vld [vmem:[#allocation6 + $0x38] sm:$0xf]
    %v93 = vld [vmem:[#allocation6 + $0x3c] sm:$0xf]
    %v94 = vld [vmem:[%s2] sm:$0x1]
    %v96 = vlaneseq
    %v97 = vshrl.u32 %v96, 7
    %v98 = vsub.s32 0, %v97
    %v99 = vrot.slane %v94, %v98
    %v103 = vunpack.c.l.b16 %v76
    %v104 = vunpack.c.l.b16 %v77
    %v105 = vpack.c.b16 %v104, %v103
    %v123 = vunpack.c.l.b16 %v78
    %v124 = vunpack.c.l.b16 %v79
    %v125 = vunpack.c.l.b16 %v80
    %v126 = vunpack.c.l.b16 %v81
    %v127 = vunpack.c.l.b16 %v82
    %v128 = vunpack.c.l.b16 %v83
    %v129 = vunpack.c.l.b16 %v84
    %v130 = vunpack.c.l.b16 %v85
    %v131 = vunpack.c.l.b16 %v86
    %v132 = vunpack.c.l.b16 %v87
    %v133 = vunpack.c.l.b16 %v88
    %v134 = vunpack.c.l.b16 %v89
    %v135 = vunpack.c.l.b16 %v90
    %v136 = vunpack.c.l.b16 %v91
    %v137 = vunpack.c.l.b16 %v92
    %v138 = vunpack.c.l.b16 %v93
    %v139 = vpack.c.b16 %v124, %v123
    %v140 = vpack.c.b16 %v126, %v125
    %v141 = vpack.c.b16 %v128, %v127
    %v142 = vpack.c.b16 %v130, %v129
    %v143 = vpack.c.b16 %v132, %v131
    %v144 = vpack.c.b16 %v134, %v133
    %v145 = vpack.c.b16 %v136, %v135
    %v146 = vpack.c.b16 %v138, %v137
    %155 = vmatprep.subr.bf16.mxu0 0
    %156 = vmatpush1.bf16.msra.mxu0 %v146
    %157 = vmatprep.subr.bf16.mxu0 0
    %158 = vmatpush1.bf16.msra.mxu0 %v145
    %159 = vmatprep.subr.bf16.mxu0 0
    %160 = vmatpush1.bf16.msra.mxu0 %v144
    %161 = vmatprep.subr.bf16.mxu0 0
    %162 = vmatpush1.bf16.msra.mxu0 %v143
    %163 = vmatprep.subr.bf16.mxu0 0
    %164 = vmatpush1.bf16.msra.mxu0 %v142
    %165 = vmatprep.subr.bf16.mxu0 0
    %166 = vmatpush1.bf16.msra.mxu0 %v141
    %167 = vmatprep.subr.bf16.mxu0 0
    %168 = vmatpush1.bf16.msra.mxu0 %v140
    %169 = vmatprep.subr.bf16.mxu0 0
    %170 = vmatpush1.bf16.msra.mxu0 %v139
    %171 = vmatprep.subr.bf16.mxu0 0
    %172 = vmatpush2.bf16.msra.mxu0 0
    %173 = vmatprep.subr.bf16.mxu0 0
    %174 = vmatpush2.bf16.msra.mxu0 0
    %175 = vmatprep.subr.bf16.mxu0 0
    %176 = vmatpush2.bf16.msra.mxu0 0
    %177 = vmatprep.subr.bf16.mxu0 0
    %178 = vmatpush2.bf16.msra.mxu0 0
    %179 = vmatprep.subr.bf16.mxu0 0
    %180 = vmatpush2.bf16.msra.mxu0 0
    %181 = vmatprep.subr.bf16.mxu0 0
    %182 = vmatpush2.bf16.msra.mxu0 0
    %183 = vmatprep.subr.bf16.mxu0 0
    %184 = vmatpush2.bf16.msra.mxu0 0
    %185 = vmatprep.subr.bf16.mxu0 0
    %186 = vmatpush2.bf16.msra.mxu0 0
    %187 = vmatprep.mubr.bf16.mxu0 0
    %188 = vmatmul.mubr.bf16.gmra.mxu0 %v105
    %v189 = vpop.f32.mrf.mxu0
    %v190 = vadd.f32 %v99, %v189
    %v191 = vpop.f32.mrf.mxu0
    %v192 = vpop.f32.mrf.mxu0
    %v193 = vadd.f32 %v99, %v192
    %v194 = vpop.f32.mrf.mxu0
    %195 = vdwg.mxu0
    %v196 = vmax.f32 %v190, 0.0
    %v197 = vmax.f32 %v193, 0.0
    %v198 = vld [vmem:[#allocation2] sm:$0xff]
    %v199 = vld [vmem:[#allocation2 + $0x8] sm:$0xff]
    %v200 = vpack.c.bf16 %v197, %v196
    %v201 = vld [vmem:[#allocation8] sm:$0xf]
    %v202 = vld [vmem:[#allocation8 + $0x4] sm:$0xf]
    %v203 = vld [vmem:[#allocation8 + $0x8] sm:$0xf]
    %v204 = vld [vmem:[#allocation8 + $0xc] sm:$0xf]
    %v205 = vld [vmem:[#allocation8 + $0x10] sm:$0xf]
    %v206 = vld [vmem:[#allocation8 + $0x14] sm:$0xf]
    %v207 = vld [vmem:[#allocation8 + $0x18] sm:$0xf]
    %v208 = vld [vmem:[#allocation8 + $0x1c] sm:$0xf]
    %v209 = vld [vmem:[#allocation8 + $0x20] sm:$0xf]
    %v210 = vld [vmem:[#allocation8 + $0x24] sm:$0xf]
    %v211 = vld [vmem:[#allocation8 + $0x28] sm:$0xf]
    %v212 = vld [vmem:[#allocation8 + $0x2c] sm:$0xf]
    %v213 = vld [vmem:[#allocation8 + $0x30] sm:$0xf]
    %v214 = vld [vmem:[#allocation8 + $0x34] sm:$0xf]
    %v215 = vld [vmem:[#allocation8 + $0x38] sm:$0xf]
    %v216 = vld [vmem:[#allocation8 + $0x3c] sm:$0xf]
    %v233 = vunpack.c.l.b16 %v201
    %v234 = vunpack.c.l.b16 %v202
    %v235 = vunpack.c.l.b16 %v203
    %v236 = vunpack.c.l.b16 %v204
    %v237 = vunpack.c.l.b16 %v205
    %v238 = vunpack.c.l.b16 %v206
    %v239 = vunpack.c.l.b16 %v207
    %v240 = vunpack.c.l.b16 %v208
    %v241 = vunpack.c.l.b16 %v209
    %v242 = vunpack.c.l.b16 %v210
    %v243 = vunpack.c.l.b16 %v211
    %v244 = vunpack.c.l.b16 %v212
    %v245 = vunpack.c.l.b16 %v213
    %v246 = vunpack.c.l.b16 %v214
    %v247 = vunpack.c.l.b16 %v215
    %v248 = vunpack.c.l.b16 %v216
    %v249 = vpack.c.b16 %v234, %v233
    %v250 = vpack.c.b16 %v236, %v235
    %v251 = vpack.c.b16 %v238, %v237
    %v252 = vpack.c.b16 %v240, %v239
    %v253 = vpack.c.b16 %v242, %v241
    %v254 = vpack.c.b16 %v244, %v243
    %v255 = vpack.c.b16 %v246, %v245
    %v256 = vpack.c.b16 %v248, %v247
    %265 = vmatprep.subr.bf16.mxu0 0
    %266 = vmatpush1.bf16.msra.mxu0 %v256
    %267 = vmatprep.subr.bf16.mxu0 0
    %268 = vmatpush1.bf16.msra.mxu0 %v255
    %269 = vmatprep.subr.bf16.mxu0 0
    %270 = vmatpush1.bf16.msra.mxu0 %v254
    %271 = vmatprep.subr.bf16.mxu0 0
    %272 = vmatpush1.bf16.msra.mxu0 %v253
    %273 = vmatprep.subr.bf16.mxu0 0
    %274 = vmatpush1.bf16.msra.mxu0 %v252
    %275 = vmatprep.subr.bf16.mxu0 0
    %276 = vmatpush1.bf16.msra.mxu0 %v251
    %277 = vmatprep.subr.bf16.mxu0 0
    %278 = vmatpush1.bf16.msra.mxu0 %v250
    %279 = vmatprep.subr.bf16.mxu0 0
    %280 = vmatpush1.bf16.msra.mxu0 %v249
    %281 = vmatprep.subr.bf16.mxu0 0
    %282 = vmatpush2.bf16.msra.mxu0 0
    %283 = vmatprep.subr.bf16.mxu0 0
    %284 = vmatpush2.bf16.msra.mxu0 0
    %285 = vmatprep.subr.bf16.mxu0 0
    %286 = vmatpush2.bf16.msra.mxu0 0
    %287 = vmatprep.subr.bf16.mxu0 0
    %288 = vmatpush2.bf16.msra.mxu0 0
    %289 = vmatprep.subr.bf16.mxu0 0
    %290 = vmatpush2.bf16.msra.mxu0 0
    %291 = vmatprep.subr.bf16.mxu0 0
    %292 = vmatpush2.bf16.msra.mxu0 0
    %293 = vmatprep.subr.bf16.mxu0 0
    %294 = vmatpush2.bf16.msra.mxu0 0
    %295 = vmatprep.subr.bf16.mxu0 0
    %296 = vmatpush2.bf16.msra.mxu0 0
    %297 = vmatprep.mubr.bf16.mxu0 0
    %298 = vmatmul.mubr.bf16.gmra.mxu0 %v200
    %v299 = vpop.f32.mrf.mxu0
    %v300 = vadd.f32 0.0, %v299
    %v301 = vpop.f32.mrf.mxu0
    %v302 = vpop.f32.mrf.mxu0
    %v303 = vadd.f32 0.0, %v302
    %v304 = vpop.f32.mrf.mxu0
    %305 = vdwg.mxu0
    %v306 = vadd.f32 %v198, %v300
    %v307 = vadd.f32 %v199, %v303
    %308 = vst [vmem:[#allocation2] sm:$0xff] %v306
    %309 = vst [vmem:[#allocation2 + $0x8] sm:$0xff] %v307
    // Predicated region
    $region38: #{tpu_custom_call.1} parent=1 // pred_check
      %p310 = pneg %p63
    $region39: #{tpu_custom_call.1} parent=1 // pred_check_branch
      %312 = sbr.rel (%p310) target = $region41
    $region40: #{tpu_custom_call.1} parent=1 // pred_region
      %v313 = vld [vmem:[#allocation2] sm:$0xff]
      %v314 = vld [vmem:[#allocation2 + $0x8] sm:$0xff]
      %315 = vst [vmem:[#allocation9] sm:$0xff] %v313
      %316 = vst [vmem:[#allocation9 + $0x8] sm:$0xff] %v314
    $region41: #{tpu_custom_call.1} parent=1 // pred_fallthru
      _
    // Predicated region
    $region42: #{tpu_custom_call.1} parent=1 // pred_check
      _
    $region43: #{tpu_custom_call.1} parent=1 // pred_check_branch
      %318 = sbr.rel (0) target = $region45
    $region44: #{tpu_custom_call.1} parent=1 // pred_region
      %s320 = ssub.s32 256, 256
      %321 = vsyncadd [#allocation5], %s320
      %s322 = sshll.u32 [#allocation9], 4
      %s323 = int_to_ptr.vmem [resolvable:$true] %s322
      %328 = dma.vmem_to_hbm [thread:$0]  %s323, 256, %s5, [#allocation5], 128, 128, 8
    $region45: #{tpu_custom_call.1} parent=1 // pred_fallthru
      _
    // Predicated region
    $region46: #{tpu_custom_call.1} parent=1 // pred_check
      _
    $region47: #{tpu_custom_call.1} parent=1 // pred_check_branch
      %330 = sbr.rel (0) target = $region49
    $region48: #{tpu_custom_call.1} parent=1 // pred_region
      %331 = dma.done [#allocation5], 256
    $region49: #{tpu_custom_call.1} parent=1 // pred_fallthru
      _
    %332 = vsyncpa [#allocation4], 1
    %333 = vsyncpa [#allocation7], 1
    %334 = vsyncpa [#allocation5], 1

</llo_original>
